<compile_context>
chip_gen: v5e
topology: v5e:2x2
jax: 0.10.0
libtpu: 0.0.40
codegen_flags: <defaults>
</compile_context>

<pallas_src>
import functools

import numpy as np
import jax
import jax.numpy as jnp
from jax.experimental import pallas as pl
from jax.experimental.pallas import tpu as pltpu


def _round_up(x, m):
    return ((x + m - 1) // m) * m


def _layer_norm_f32(v, true_dim, eps):
    """Single-pass LayerNorm over the lane axis.

    `v` is (rows, d_model_p) f32 whose padded lanes are zero, so the lane sums
    are exact; divide by the TRUE feature count, not the padded one.
    """
    inv_n = 1.0 / float(true_dim)
    s = jnp.sum(v, axis=-1, keepdims=True)
    ss = jnp.sum(v * v, axis=-1, keepdims=True)
    mean = s * inv_n
    var = jnp.maximum(ss * inv_n - mean * mean, 0.0)
    return (v - mean) * jax.lax.rsqrt(var + eps)


# --------------------------------------------------------------------------
# Kernel bodies
# --------------------------------------------------------------------------
def _ffn_kernel_full(x_ref, w1_ref, b1_ref, w2_ref, b2_ref, o_ref, *,
                     pre_lnorm, eps, d_model):
    """Whole d_inner resident: one grid axis over row tiles."""
    x = x_ref[...]                                    # (tm, d_model_p)

    if pre_lnorm:
        ffn_in = _layer_norm_f32(x.astype(jnp.float32), d_model, eps).astype(x.dtype)
    else:
        ffn_in = x

    h = jnp.dot(ffn_in, w1_ref[...], preferred_element_type=jnp.float32)
    h = jnp.maximum(h + b1_ref[...], 0.0)             # (tm, d_inner_p) f32

    y = jnp.dot(h.astype(w2_ref.dtype), w2_ref[...],
                preferred_element_type=jnp.float32)
    y = y + b2_ref[...] + x.astype(jnp.float32)

    out = y if pre_lnorm else _layer_norm_f32(y, d_model, eps)
    o_ref[...] = out.astype(o_ref.dtype)


def _ffn_kernel_stream(x_ref, w1_ref, b1_ref, w2_ref, b2_ref, o_ref, acc_ref,
                       *ln_scratch, pre_lnorm, eps, d_model):
    """d_inner streamed over the trailing ("arbitrary") grid axis."""
    k = pl.program_id(1)
    nk = pl.num_programs(1)

    x = x_ref[...]                                    # (tm, d_model_p)

    if pre_lnorm:
        ln_ref = ln_scratch[0]

        @pl.when(k == 0)
        def _():
            acc_ref[...] = jnp.zeros_like(acc_ref)
            ln_ref[...] = _layer_norm_f32(
                x.astype(jnp.float32), d_model, eps).astype(ln_ref.dtype)

        ffn_in = ln_ref[...]
    else:
        @pl.when(k == 0)
        def _():
            acc_ref[...] = jnp.zeros_like(acc_ref)

        ffn_in = x

    # ff1 + ReLU for this d_inner chunk (MXU, f32 accumulate).
    h = jnp.dot(ffn_in, w1_ref[...], preferred_element_type=jnp.float32)
    h = jnp.maximum(h + b1_ref[...], 0.0)             # (tm, tk) f32

    # ff2 partial product, accumulated across d_inner chunks.
    acc_ref[...] += jnp.dot(h.astype(w2_ref.dtype), w2_ref[...],
                            preferred_element_type=jnp.float32)

    @pl.when(k == nk - 1)
    def _():
        y = acc_ref[...] + b2_ref[...] + x.astype(jnp.float32)
        out = y if pre_lnorm else _layer_norm_f32(y, d_model, eps)
        o_ref[...] = out.astype(o_ref.dtype)


# --------------------------------------------------------------------------
# Wrapper
# --------------------------------------------------------------------------
def _vmem_bytes(tm, dmp, tk, cbytes, obytes):
    """Per-call VMEM footprint estimate (double-buffered BlockSpec inputs)."""
    return (2 * tm * dmp * cbytes          # x tiles
            + 2 * tm * dmp * obytes        # out tiles
            + 2 * dmp * tk * cbytes        # W1 chunk tiles
            + 2 * tk * dmp * cbytes        # W2 chunk tiles
            + 2 * (tk + dmp) * 4           # bias tiles (f32)
            + tm * dmp * 4                 # f32 accumulator / y
            + tm * dmp * cbytes            # pre-LN scratch / ffn_in
            + tm * tk * 4)                 # h intermediate (f32)


def _pad2d(a, shape, dtype):
    if tuple(a.shape) == tuple(shape) and a.dtype == dtype:
        return a
    out = jnp.zeros(shape, dtype)
    return out.at[:a.shape[0], :a.shape[1]].set(a.astype(dtype))


def ffn_forward(inp, w1, b1, w2, b2, *, pre_lnorm=False, eps=1e-5,
                tm=256, tk=None, compute_dtype=None,
                vmem_budget_bytes=40 << 20):
    """inp: (B, d_model, L) — same layout as the PyTorch module input.

    w1: (d_inner, d_model), b1: (d_inner,)   (PyTorch Linear layout)
    w2: (d_model, d_inner), b2: (d_model,)

    tm: row tile (tokens per grid step).  tk: force a d_inner chunk size
    (None = auto: whole d_inner if it fits the VMEM budget, else streamed).
    compute_dtype: matmul operand dtype (defaults to inp.dtype; pass bf16 for
    bf16-native MXU throughput — accumulation stays f32 either way).
    """
    B, d_model, L = inp.shape
    d_inner = w1.shape[0]
    out_dtype = inp.dtype
    compute_dtype = compute_dtype or inp.dtype
    cbytes = np.dtype(compute_dtype).itemsize
    obytes = np.dtype(out_dtype).itemsize

    # NCL -> NLC -> (rows, d_model)
    x = jnp.transpose(inp, (0, 2, 1)).reshape(B * L, d_model)

    rows = B * L
    d_model_p = _round_up(d_model, 128)
    d_inner_p = _round_up(d_inner, 128)
    tm_eff = min(tm, _round_up(rows, 128))            # keep tiny inputs light
    rows_p = _round_up(rows, tm_eff)

    # ---- choose d_inner chunking -----------------------------------------
    if tk is None:
        tk_eff = 128
        for nk_cand in range(1, d_inner_p // 128 + 1):
            if d_inner_p % (nk_cand * 128):
                continue
            cand = d_inner_p // nk_cand
            if _vmem_bytes(tm_eff, d_model_p, cand, cbytes, obytes) <= vmem_budget_bytes:
                tk_eff = cand
                break
    else:
        tk_eff = max(128, min(_round_up(tk, 128), d_inner_p))
        while d_inner_p % tk_eff:
            tk_eff -= 128
    nk = d_inner_p // tk_eff

    # ---- zero-pad operands to lane/sublane-friendly shapes ----------------
    # Padded lanes/rows contribute nothing to the matmuls or the LN sums
    # (stats divide by the true d_model).
    x_p = _pad2d(x, (rows_p, d_model_p), compute_dtype)
    w1_p = _pad2d(jnp.transpose(w1), (d_model_p, d_inner_p), compute_dtype)
    w2_p = _pad2d(jnp.transpose(w2), (d_inner_p, d_model_p), compute_dtype)
    b1_p = _pad2d(b1.reshape(1, -1), (1, d_inner_p), jnp.float32)
    b2_p = _pad2d(b2.reshape(1, -1), (1, d_model_p), jnp.float32)

    vmem_need = _vmem_bytes(tm_eff, d_model_p, tk_eff, cbytes, obytes)
    vmem_limit = min(max(int(vmem_need * 3 // 2) + (4 << 20), 16 << 20), 64 << 20)

    if nk == 1:
        # Whole d_inner resident; weights DMA'd once (constant index_map).
        kernel = functools.partial(_ffn_kernel_full, pre_lnorm=pre_lnorm,
                                   eps=eps, d_model=d_model)
        out_flat = pl.pallas_call(
            kernel,
            out_shape=jax.ShapeDtypeStruct((rows_p, d_model_p), out_dtype),
            grid_spec=pltpu.PrefetchScalarGridSpec(
                num_scalar_prefetch=0,
                grid=(rows_p // tm_eff,),
                in_specs=[
                    pl.BlockSpec((tm_eff, d_model_p), lambda i: (i, 0)),       # x
                    pl.BlockSpec((d_model_p, d_inner_p), lambda i: (0, 0)),    # W1
                    pl.BlockSpec((1, d_inner_p), lambda i: (0, 0)),            # b1
                    pl.BlockSpec((d_inner_p, d_model_p), lambda i: (0, 0)),    # W2
                    pl.BlockSpec((1, d_model_p), lambda i: (0, 0)),            # b2
                ],
                out_specs=pl.BlockSpec((tm_eff, d_model_p), lambda i: (i, 0)),
            ),
            compiler_params=pltpu.CompilerParams(
                dimension_semantics=("parallel",),
                vmem_limit_bytes=vmem_limit,
            ),
        )(x_p, w1_p, b1_p, w2_p, b2_p)
    else:
        # Stream d_inner chunks; accumulate ff2 partials in f32 scratch.
        kernel = functools.partial(_ffn_kernel_stream, pre_lnorm=pre_lnorm,
                                   eps=eps, d_model=d_model)
        scratch = [pltpu.VMEM((tm_eff, d_model_p), jnp.float32)]
        if pre_lnorm:
            scratch.append(pltpu.VMEM((tm_eff, d_model_p), compute_dtype))
        out_flat = pl.pallas_call(
            kernel,
            out_shape=jax.ShapeDtypeStruct((rows_p, d_model_p), out_dtype),
            grid_spec=pltpu.PrefetchScalarGridSpec(
                num_scalar_prefetch=0,
                grid=(rows_p // tm_eff, nk),
                in_specs=[
                    pl.BlockSpec((tm_eff, d_model_p), lambda i, k: (i, 0)),    # x
                    pl.BlockSpec((d_model_p, tk_eff), lambda i, k: (0, k)),    # W1 chunk
                    pl.BlockSpec((1, tk_eff), lambda i, k: (0, k)),            # b1 chunk
                    pl.BlockSpec((tk_eff, d_model_p), lambda i, k: (k, 0)),    # W2 chunk
                    pl.BlockSpec((1, d_model_p), lambda i, k: (0, 0)),         # b2
                ],
                out_specs=pl.BlockSpec((tm_eff, d_model_p), lambda i, k: (i, 0)),
                scratch_shapes=scratch,
            ),
            compiler_params=pltpu.CompilerParams(
                dimension_semantics=("parallel", "arbitrary"),
                vmem_limit_bytes=vmem_limit,
            ),
        )(x_p, w1_p, b1_p, w2_p, b2_p)

    # Drop padding, (rows, d_model) -> (B, L, d_model) -> (B, d_model, L).
    out = out_flat[:rows, :d_model].reshape(B, L, d_model)
    return jnp.transpose(out, (0, 2, 1))


# --------------------------------------------------------------------------
# Pure-JAX reference mirroring the PyTorch module (eval mode)
# --------------------------------------------------------------------------
def _reference(inp, w1, b1, w2, b2, *, pre_lnorm=False, eps=1e-5):
    x = jnp.transpose(inp, (0, 2, 1)).astype(jnp.float32)   # (B, L, d_model)

    def ln(v):
        mean = jnp.mean(v, axis=-1, keepdims=True)
        var = jnp.mean((v - mean) ** 2, axis=-1, keepdims=True)
        return (v - mean) / jnp.sqrt(var + eps)

    ffn_in = ln(x) if pre_lnorm else x
    h = jax.nn.relu(ffn_in @ w1.T.astype(jnp.float32) + b1)
    y = h @ w2.T.astype(jnp.float32) + b2 + x
    out = y if pre_lnorm else ln(y)
    return jnp.transpose(out, (0, 2, 1)).astype(inp.dtype)


def _make_params(key, d_model, d_inner):
    k_w1, k_b1, k_w2, k_b2 = jax.random.split(key, 4)
    bound1 = 1.0 / (d_model ** 0.5)
    bound2 = 1.0 / (d_inner ** 0.5)
    w1 = jax.random.uniform(k_w1, (d_inner, d_model), jnp.float32, -bound1, bound1)
    b1 = jax.random.uniform(k_b1, (d_inner,), jnp.float32, -bound1, bound1)
    w2 = jax.random.uniform(k_w2, (d_model, d_inner), jnp.float32, -bound2, bound2)
    b2 = jax.random.uniform(k_b2, (d_model,), jnp.float32, -bound2, bound2)
    return w1, b1, w2, b2


if __name__ == "__main__":
    key = jax.random.PRNGKey(0)
    k_inp, k_par, k_inp2, k_par2 = jax.random.split(key, 4)

    # ---- case 1: tiny shapes, "full" (weights-resident) path --------------
    B, d_model, L, d_inner = 2, 32, 8, 64
    inp = jax.random.normal(k_inp, (B, d_model, L), dtype=jnp.float32)
    w1, b1, w2, b2 = _make_params(k_par, d_model, d_inner)

    for pre in (False, True):
        out = jax.block_until_ready(
            ffn_forward(inp, w1, b1, w2, b2, pre_lnorm=pre))
        ref = _reference(inp, w1, b1, w2, b2, pre_lnorm=pre)
        assert out.shape == (B, d_model, L)
        assert jnp.allclose(out, ref, atol=1e-4, rtol=1e-4), (
            f"full-path mismatch (pre_lnorm={pre})")

    # ---- case 2: force the d_inner-streaming path (tk < d_inner_p) --------
    B2, d_model2, L2, d_inner2 = 2, 32, 8, 256
    inp2 = jax.random.normal(k_inp2, (B2, d_model2, L2), dtype=jnp.float32)
    w1b, b1b, w2b, b2b = _make_params(k_par2, d_model2, d_inner2)

    for pre in (False, True):
        out2 = jax.block_until_ready(
            ffn_forward(inp2, w1b, b1b, w2b, b2b, pre_lnorm=pre, tk=128))
        ref2 = _reference(inp2, w1b, b1b, w2b, b2b, pre_lnorm=pre)
        assert out2.shape == (B2, d_model2, L2)
        assert jnp.allclose(out2, ref2, atol=1e-4, rtol=1e-4), (
            f"stream-path mismatch (pre_lnorm={pre})")

    print("KERNEL_OK")
</pallas_src>

<mosaic_0001>
module attributes {stable_mosaic.version = 11 : i64} {
  func.func @_ffn_kernel_full(%arg0: i32, %arg1: memref<128x128xf32, #tpu.memory_space<vmem>>, %arg2: memref<128x128xf32, #tpu.memory_space<vmem>>, %arg3: memref<1x128xf32, #tpu.memory_space<vmem>>, %arg4: memref<128x128xf32, #tpu.memory_space<vmem>>, %arg5: memref<1x128xf32, #tpu.memory_space<vmem>>, %arg6: memref<128x128xf32, #tpu.memory_space<vmem>>) attributes {dimension_semantics = [#tpu.dimension_semantics<parallel>], iteration_bounds = array<i64: 1>, scalar_prefetch = 0 : i64, scratch_operands = 0 : i64, tpu.core_type = #tpu.core_type<tc>, window_params = [{transform_indices = @transform_0, window_bounds = array<i64: 128, 128>}, {pipeline_mode = #tpu.pipeline_mode<synchronous>, transform_indices = @transform_1, window_bounds = array<i64: 128, 128>}, {pipeline_mode = #tpu.pipeline_mode<synchronous>, transform_indices = @transform_2, window_bounds = array<i64: 1, 128>}, {pipeline_mode = #tpu.pipeline_mode<synchronous>, transform_indices = @transform_3, window_bounds = array<i64: 128, 128>}, {pipeline_mode = #tpu.pipeline_mode<synchronous>, transform_indices = @transform_4, window_bounds = array<i64: 1, 128>}, {transform_indices = @transform_5, window_bounds = array<i64: 128, 128>}]} {
    %c0 = arith.constant 0 : index
    %c0_0 = arith.constant 0 : index
    %0 = vector.load %arg1[%c0, %c0_0] : memref<128x128xf32, #tpu.memory_space<vmem>>, vector<128x128xf32>
    %c0_1 = arith.constant 0 : index
    %c0_2 = arith.constant 0 : index
    %1 = vector.load %arg2[%c0_1, %c0_2] : memref<128x128xf32, #tpu.memory_space<vmem>>, vector<128x128xf32>
    %cst = arith.constant dense<0.000000e+00> : vector<128x128xf32>
    %2 = tpu.matmul %0, %1, %cst {dimension_numbers = #tpu.dot_dimension_numbers<[1], [0], [0], [1], [0, 0, 1, 1], [], []>} : vector<128x128xf32>, vector<128x128xf32>, vector<128x128xf32> -> vector<128x128xf32>
    %c0_3 = arith.constant 0 : index
    %c0_4 = arith.constant 0 : index
    %3 = vector.load %arg3[%c0_3, %c0_4] : memref<1x128xf32, #tpu.memory_space<vmem>>, vector<1x128xf32>
    %4 = vector.broadcast %3 : vector<1x128xf32> to vector<128x128xf32>
    %5 = arith.addf %2, %4 : vector<128x128xf32>
    %cst_5 = arith.constant 0.000000e+00 : f32
    %6 = vector.broadcast %cst_5 : f32 to vector<128x128xf32>
    %7 = arith.maximumf %5, %6 : vector<128x128xf32>
    %c0_6 = arith.constant 0 : index
    %c0_7 = arith.constant 0 : index
    %8 = vector.load %arg4[%c0_6, %c0_7] : memref<128x128xf32, #tpu.memory_space<vmem>>, vector<128x128xf32>
    %cst_8 = arith.constant dense<0.000000e+00> : vector<128x128xf32>
    %9 = tpu.matmul %7, %8, %cst_8 {dimension_numbers = #tpu.dot_dimension_numbers<[1], [0], [0], [1], [0, 0, 1, 1], [], []>} : vector<128x128xf32>, vector<128x128xf32>, vector<128x128xf32> -> vector<128x128xf32>
    %c0_9 = arith.constant 0 : index
    %c0_10 = arith.constant 0 : index
    %10 = vector.load %arg5[%c0_9, %c0_10] : memref<1x128xf32, #tpu.memory_space<vmem>>, vector<1x128xf32>
    %11 = vector.broadcast %10 : vector<1x128xf32> to vector<128x128xf32>
    %12 = arith.addf %9, %11 : vector<128x128xf32>
    %13 = arith.addf %12, %0 : vector<128x128xf32>
    %cst_11 = arith.constant dense<0.000000e+00> : vector<128xf32>
    %14 = vector.multi_reduction <add>, %13, %cst_11 [1] : vector<128x128xf32> to vector<128xf32>
    %15 = vector.shape_cast %14 : vector<128xf32> to vector<128x1xf32>
    %16 = arith.mulf %13, %13 : vector<128x128xf32>
    %cst_12 = arith.constant dense<0.000000e+00> : vector<128xf32>
    %17 = vector.multi_reduction <add>, %16, %cst_12 [1] : vector<128x128xf32> to vector<128xf32>
    %18 = vector.shape_cast %17 : vector<128xf32> to vector<128x1xf32>
    %cst_13 = arith.constant 3.125000e-02 : f32
    %19 = vector.broadcast %cst_13 : f32 to vector<128x1xf32>
    %20 = arith.mulf %15, %19 : vector<128x1xf32>
    %cst_14 = arith.constant 3.125000e-02 : f32
    %21 = vector.broadcast %cst_14 : f32 to vector<128x1xf32>
    %22 = arith.mulf %18, %21 : vector<128x1xf32>
    %23 = arith.mulf %20, %20 : vector<128x1xf32>
    %24 = arith.subf %22, %23 : vector<128x1xf32>
    %cst_15 = arith.constant 0.000000e+00 : f32
    %25 = vector.broadcast %cst_15 : f32 to vector<128x1xf32>
    %26 = arith.maximumf %24, %25 : vector<128x1xf32>
    %27 = vector.broadcast %20 : vector<128x1xf32> to vector<128x128xf32>
    %28 = arith.subf %13, %27 : vector<128x128xf32>
    %cst_16 = arith.constant 9.99999974E-6 : f32
    %29 = vector.broadcast %cst_16 : f32 to vector<128x1xf32>
    %30 = arith.addf %26, %29 : vector<128x1xf32>
    %31 = math.rsqrt %30 : vector<128x1xf32>
    %32 = vector.broadcast %31 : vector<128x1xf32> to vector<128x128xf32>
    %33 = arith.mulf %28, %32 : vector<128x128xf32>
    %c0_17 = arith.constant 0 : index
    %c0_18 = arith.constant 0 : index
    %34 = vector.load %arg6[%c0_17, %c0_18] : memref<128x128xf32, #tpu.memory_space<vmem>>, vector<128x128xf32>
    tpu.vector_store %arg6[%c0_17, %c0_18], %33 {strides = array<i32>} : memref<128x128xf32, #tpu.memory_space<vmem>>, vector<128x128xf32>,
    return
  }
  func.func @transform_0(%arg0: i32) -> (i32, i32) {
    %c0_i32 = arith.constant 0 : i32
    %c0_i32_0 = arith.constant 0 : i32
    return %arg0, %c0_i32 : i32, i32
  }
  func.func @transform_1(%arg0: i32) -> (i32, i32) {
    %c0_i32 = arith.constant 0 : i32
    %c0_i32_0 = arith.constant 0 : i32
    %c0_i32_1 = arith.constant 0 : i32
    return %c0_i32, %c0_i32_0 : i32, i32
  }
  func.func @transform_2(%arg0: i32) -> (i32, i32) {
    %c0_i32 = arith.constant 0 : i32
    %c0_i32_0 = arith.constant 0 : i32
    %c0_i32_1 = arith.constant 0 : i32
    return %c0_i32, %c0_i32_0 : i32, i32
  }
  func.func @transform_3(%arg0: i32) -> (i32, i32) {
    %c0_i32 = arith.constant 0 : i32
    %c0_i32_0 = arith.constant 0 : i32
    %c0_i32_1 = arith.constant 0 : i32
    return %c0_i32, %c0_i32_0 : i32, i32
  }
  func.func @transform_4(%arg0: i32) -> (i32, i32) {
    %c0_i32 = arith.constant 0 : i32
    %c0_i32_0 = arith.constant 0 : i32
    %c0_i32_1 = arith.constant 0 : i32
    return %c0_i32, %c0_i32_0 : i32, i32
  }
  func.func @transform_5(%arg0: i32) -> (i32, i32) {
    %c0_i32 = arith.constant 0 : i32
    %c0_i32_0 = arith.constant 0 : i32
    return %arg0, %c0_i32 : i32, i32
  }
}

</mosaic_0001>

<llo_original>
// kernel: tpu_custom_call.1
$region0: #{tpu_custom_call.1}
  #allocation0 [shape = 'u32[]', space=smem, size = 0x4, offset = 0x4, fixed_abs, tag = 'smem constant byte address 0x4 - core index']
  #allocation1 [shape = 'u32[72,128]{1,0:T(1,128)}', space=vmem, size = 0x9000, scoped, tag = 'internal scratch']
  %s0 = inlined_call_operand.hbm [shape: f32[128,128], index: 0, kind: input, shape index: {}]
  %s1 = inlined_call_operand.hbm [shape: f32[128,128], index: 1, kind: input, shape index: {}]
  %s2 = inlined_call_operand.vmem [shape: f32[1,128], index: 2, kind: input, shape index: {}]
  %s3 = inlined_call_operand.hbm [shape: f32[128,128], index: 3, kind: input, shape index: {}]
  %s4 = inlined_call_operand.vmem [shape: f32[1,128], index: 4, kind: input, shape index: {}]
  %s5 = inlined_call_operand.hbm [shape: f32[128,128], index: 5, kind: output, shape index: {}]
  %s6 = sld [smem:[#allocation0]]
  $region42: #{tpu_custom_call.1} parent=0
    _
  %s8 = ssub.s32 1, %s6
  %s9 = scalar_select 0, %s8, %s6
  $region1: #{tpu_custom_call.1} parent=0
    #allocation2 [shape = 'u8[65536]{0}', space=vmem, size = 0x10000, scoped, tag = 'input window, operand 0, single buffered']
    #allocation3 [shape = 's32[1]{0}', space=sflag, size = 0x4, scoped, tag = 'scoped memory for tpu_custom_call.1']
    #allocation4 [shape = 's32[1]{0}', space=sflag, size = 0x4, scoped, tag = 'scoped memory for tpu_custom_call.1']
    #allocation5 [shape = 'u8[65536]{0}', space=vmem, size = 0x10000, scoped, tag = 'input window, operand 1, single buffered']
    #allocation6 [shape = 's32[1]{0}', space=sflag, size = 0x4, scoped, tag = 'scoped memory for tpu_custom_call.1']
    #allocation7 [shape = 'u8[65536]{0}', space=vmem, size = 0x10000, scoped, tag = 'input window, operand 3, single buffered']
    #allocation8 [shape = 'u8[65536]{0}', space=vmem, size = 0x10000, scoped, tag = 'output window, operand 0, single buffered']
    %10 = vsyncpa [#allocation3], 0
    %11 = vsyncpa [#allocation6], 0
    %12 = vsyncpa [#allocation4], 0
    // Predicated region
    $region2: #{tpu_custom_call.1} parent=1 // pred_check
      _
    $region3: #{tpu_custom_call.1} parent=1 // pred_check_branch
      %14 = sbr.rel (0) target = $region5
    $region4: #{tpu_custom_call.1} parent=1 // pred_region
      %16 = vsyncadd [#allocation3], 0
      %s17 = sshll.u32 %s0, 4
      %s18 = int_to_ptr.hbm [resolvable:$true] %s17
      %s19 = sshll.u32 [#allocation2], 4
      %s20 = int_to_ptr.vmem [resolvable:$true] %s19
      %25 = dma.hbm_to_vmem [thread:$0]  %s18, 2048, %s20, [#allocation3], 128, 128, 8
    $region5: #{tpu_custom_call.1} parent=1 // pred_fallthru
      _
    // Predicated region
    $region6: #{tpu_custom_call.1} parent=1 // pred_check
      _
    $region7: #{tpu_custom_call.1} parent=1 // pred_check_branch
      %27 = sbr.rel (0) target = $region9
    $region8: #{tpu_custom_call.1} parent=1 // pred_region
      %29 = vsyncadd [#allocation6], 0
      %s30 = sshll.u32 %s1, 4
      %s31 = int_to_ptr.hbm [resolvable:$true] %s30
      %s32 = sshll.u32 [#allocation5], 4
      %s33 = int_to_ptr.vmem [resolvable:$true] %s32
      %38 = dma.hbm_to_vmem [thread:$0]  %s31, 2048, %s33, [#allocation6], 128, 128, 8
    $region9: #{tpu_custom_call.1} parent=1 // pred_fallthru
      _
    // Predicated region
    $region10: #{tpu_custom_call.1} parent=1 // pred_check
      _
    $region11: #{tpu_custom_call.1} parent=1 // pred_check_branch
      %40 = sbr.rel (0) target = $region13
    $region12: #{tpu_custom_call.1} parent=1 // pred_region
      _
    $region13: #{tpu_custom_call.1} parent=1 // pred_fallthru
      _
    // Predicated region
    $region14: #{tpu_custom_call.1} parent=1 // pred_check
      _
    $region15: #{tpu_custom_call.1} parent=1 // pred_check_branch
      %42 = sbr.rel (0) target = $region17
    $region16: #{tpu_custom_call.1} parent=1 // pred_region
      %44 = vsyncadd [#allocation6], 0
      %s45 = sshll.u32 %s3, 4
      %s46 = int_to_ptr.hbm [resolvable:$true] %s45
      %s47 = sshll.u32 [#allocation7], 4
      %s48 = int_to_ptr.vmem [resolvable:$true] %s47
      %53 = dma.hbm_to_vmem [thread:$0]  %s46, 2048, %s48, [#allocation6], 128, 128, 8
    $region17: #{tpu_custom_call.1} parent=1 // pred_fallthru
      _
    // Predicated region
    $region18: #{tpu_custom_call.1} parent=1 // pred_check
      _
    $region19: #{tpu_custom_call.1} parent=1 // pred_check_branch
      %55 = sbr.rel (0) target = $region21
    $region20: #{tpu_custom_call.1} parent=1 // pred_region
      _
    $region21: #{tpu_custom_call.1} parent=1 // pred_fallthru
      _
    // Predicated region
    $region22: #{tpu_custom_call.1} parent=1 // pred_check
      _
    $region23: #{tpu_custom_call.1} parent=1 // pred_check_branch
      %57 = sbr.rel (0) target = $region25
    $region24: #{tpu_custom_call.1} parent=1 // pred_region
      %59 = dma.done [#allocation3], 2048
    $region25: #{tpu_custom_call.1} parent=1 // pred_fallthru
      _
    // Predicated region
    $region26: #{tpu_custom_call.1} parent=1 // pred_check
      _
    $region27: #{tpu_custom_call.1} parent=1 // pred_check_branch
      %61 = sbr.rel (0) target = $region29
    $region28: #{tpu_custom_call.1} parent=1 // pred_region
      %63 = dma.done [#allocation6], 2048
    $region29: #{tpu_custom_call.1} parent=1 // pred_fallthru
      _
    // Predicated region
    $region30: #{tpu_custom_call.1} parent=1 // pred_check
      _
    $region31: #{tpu_custom_call.1} parent=1 // pred_check_branch
      %65 = sbr.rel (0) target = $region33
    $region32: #{tpu_custom_call.1} parent=1 // pred_region
      %67 = dma.done [#allocation6], 2048
    $region33: #{tpu_custom_call.1} parent=1 // pred_fallthru
      _
    %v68 = vld [vmem:[#allocation2] sm:$0xff]
    %v69 = vld [vmem:[#allocation2 + $0x8] sm:$0xff]
    %v70 = vld [vmem:[#allocation2 + $0x10] sm:$0xff]
    %v71 = vld [vmem:[#allocation2 + $0x18] sm:$0xff]
    %v72 = vld [vmem:[#allocation2 + $0x20] sm:$0xff]
    %v73 = vld [vmem:[#allocation2 + $0x28] sm:$0xff]
    %v74 = vld [vmem:[#allocation2 + $0x30] sm:$0xff]
    %v75 = vld [vmem:[#allocation2 + $0x38] sm:$0xff]
    %v76 = vld [vmem:[#allocation2 + $0x40] sm:$0xff]
    %v77 = vld [vmem:[#allocation2 + $0x48] sm:$0xff]
    %v78 = vld [vmem:[#allocation2 + $0x50] sm:$0xff]
    %v79 = vld [vmem:[#allocation2 + $0x58] sm:$0xff]
    %v80 = vld [vmem:[#allocation2 + $0x60] sm:$0xff]
    %v81 = vld [vmem:[#allocation2 + $0x68] sm:$0xff]
    %v82 = vld [vmem:[#allocation2 + $0x70] sm:$0xff]
    %v83 = vld [vmem:[#allocation2 + $0x78] sm:$0xff]
    %v84 = vld [vmem:[#allocation5] sm:$0xff]
    %v85 = vld [vmem:[#allocation5 + $0x8] sm:$0xff]
    %v86 = vld [vmem:[#allocation5 + $0x10] sm:$0xff]
    %v87 = vld [vmem:[#allocation5 + $0x18] sm:$0xff]
    %v88 = vld [vmem:[#allocation5 + $0x20] sm:$0xff]
    %v89 = vld [vmem:[#allocation5 + $0x28] sm:$0xff]
    %v90 = vld [vmem:[#allocation5 + $0x30] sm:$0xff]
    %v91 = vld [vmem:[#allocation5 + $0x38] sm:$0xff]
    %v92 = vld [vmem:[#allocation5 + $0x40] sm:$0xff]
    %v93 = vld [vmem:[#allocation5 + $0x48] sm:$0xff]
    %v94 = vld [vmem:[#allocation5 + $0x50] sm:$0xff]
    %v95 = vld [vmem:[#allocation5 + $0x58] sm:$0xff]
    %v96 = vld [vmem:[#allocation5 + $0x60] sm:$0xff]
    %v97 = vld [vmem:[#allocation5 + $0x68] sm:$0xff]
    %v98 = vld [vmem:[#allocation5 + $0x70] sm:$0xff]
    %v99 = vld [vmem:[#allocation5 + $0x78] sm:$0xff]
    %v100 = vld [vmem:[%s2] sm:$0x1]
    %v102 = vperm.slane %v100, 0
    %104 = vmatpush.msra.mxu0 %v99
    %105 = vmatpush.msra.mxu0 %v98
    %106 = vmatpush.msra.mxu0 %v97
    %107 = vmatpush.msra.mxu0 %v96
    %108 = vmatpush.msra.mxu0 %v95
    %109 = vmatpush.msra.mxu0 %v94
    %110 = vmatpush.msra.mxu0 %v93
    %111 = vmatpush.msra.mxu0 %v92
    %112 = vmatpush.msra.mxu0 %v91
    %113 = vmatpush.msra.mxu0 %v90
    %114 = vmatpush.msra.mxu0 %v89
    %115 = vmatpush.msra.mxu0 %v88
    %116 = vmatpush.msra.mxu0 %v87
    %117 = vmatpush.msra.mxu0 %v86
    %118 = vmatpush.msra.mxu0 %v85
    %119 = vmatpush.msra.mxu0 %v84
    %120 = vmatmul.f32.gmra.mxu0 %v68
    %v121 = vpop.f32.mrf.mxu0
    %v122 = vadd.f32 %v102, %v121
    %123 = vmatmul.f32.gmra.mxu0 %v69
    %v124 = vpop.f32.mrf.mxu0
    %v125 = vadd.f32 %v102, %v124
    %126 = vmatmul.f32.gmra.mxu0 %v70
    %v127 = vpop.f32.mrf.mxu0
    %v128 = vadd.f32 %v102, %v127
    %129 = vmatmul.f32.gmra.mxu0 %v71
    %v130 = vpop.f32.mrf.mxu0
    %v131 = vadd.f32 %v102, %v130
    %132 = vmatmul.f32.gmra.mxu0 %v72
    %v133 = vpop.f32.mrf.mxu0
    %v134 = vadd.f32 %v102, %v133
    %135 = vmatmul.f32.gmra.mxu0 %v73
    %v136 = vpop.f32.mrf.mxu0
    %v137 = vadd.f32 %v102, %v136
    %138 = vmatmul.f32.gmra.mxu0 %v74
    %v139 = vpop.f32.mrf.mxu0
    %v140 = vadd.f32 %v102, %v139
    %141 = vmatmul.f32.gmra.mxu0 %v75
    %v142 = vpop.f32.mrf.mxu0
    %v143 = vadd.f32 %v102, %v142
    %144 = vmatmul.f32.gmra.mxu0 %v76
    %v145 = vpop.f32.mrf.mxu0
    %v146 = vadd.f32 %v102, %v145
    %147 = vmatmul.f32.gmra.mxu0 %v77
    %v148 = vpop.f32.mrf.mxu0
    %v149 = vadd.f32 %v102, %v148
    %150 = vmatmul.f32.gmra.mxu0 %v78
    %v151 = vpop.f32.mrf.mxu0
    %v152 = vadd.f32 %v102, %v151
    %153 = vmatmul.f32.gmra.mxu0 %v79
    %v154 = vpop.f32.mrf.mxu0
    %v155 = vadd.f32 %v102, %v154
    %156 = vmatmul.f32.gmra.mxu0 %v80
    %v157 = vpop.f32.mrf.mxu0
    %v158 = vadd.f32 %v102, %v157
    %159 = vmatmul.f32.gmra.mxu0 %v81
    %v160 = vpop.f32.mrf.mxu0
    %v161 = vadd.f32 %v102, %v160
    %162 = vmatmul.f32.gmra.mxu0 %v82
    %v163 = vpop.f32.mrf.mxu0
    %v164 = vadd.f32 %v102, %v163
    %165 = vmatmul.f32.gmra.mxu0 %v83
    %v166 = vpop.f32.mrf.mxu0
    %v167 = vadd.f32 %v102, %v166
    %168 = vdwg.mxu0
    %v169 = vmax.f32 %v122, 0.0
    %v170 = vmax.f32 %v125, 0.0
    %v171 = vmax.f32 %v128, 0.0
    %v172 = vmax.f32 %v131, 0.0
    %v173 = vmax.f32 %v134, 0.0
    %v174 = vmax.f32 %v137, 0.0
    %v175 = vmax.f32 %v140, 0.0
    %v176 = vmax.f32 %v143, 0.0
    %v177 = vmax.f32 %v146, 0.0
    %v178 = vmax.f32 %v149, 0.0
    %v179 = vmax.f32 %v152, 0.0
    %v180 = vmax.f32 %v155, 0.0
    %v181 = vmax.f32 %v158, 0.0
    %v182 = vmax.f32 %v161, 0.0
    %v183 = vmax.f32 %v164, 0.0
    %v184 = vmax.f32 %v167, 0.0
    %v185 = vld [vmem:[#allocation7] sm:$0xff]
    %v186 = vld [vmem:[#allocation7 + $0x8] sm:$0xff]
    %v187 = vld [vmem:[#allocation7 + $0x10] sm:$0xff]
    %v188 = vld [vmem:[#allocation7 + $0x18] sm:$0xff]
    %v189 = vld [vmem:[#allocation7 + $0x20] sm:$0xff]
    %v190 = vld [vmem:[#allocation7 + $0x28] sm:$0xff]
    %v191 = vld [vmem:[#allocation7 + $0x30] sm:$0xff]
    %v192 = vld [vmem:[#allocation7 + $0x38] sm:$0xff]
    %v193 = vld [vmem:[#allocation7 + $0x40] sm:$0xff]
    %v194 = vld [vmem:[#allocation7 + $0x48] sm:$0xff]
    %v195 = vld [vmem:[#allocation7 + $0x50] sm:$0xff]
    %v196 = vld [vmem:[#allocation7 + $0x58] sm:$0xff]
    %v197 = vld [vmem:[#allocation7 + $0x60] sm:$0xff]
    %v198 = vld [vmem:[#allocation7 + $0x68] sm:$0xff]
    %v199 = vld [vmem:[#allocation7 + $0x70] sm:$0xff]
    %v200 = vld [vmem:[#allocation7 + $0x78] sm:$0xff]
    %v201 = vld [vmem:[%s4] sm:$0x1]
    %v203 = vperm.slane %v201, 0
    %205 = vmatpush.msra.mxu0 %v200
    %206 = vmatpush.msra.mxu0 %v199
    %207 = vmatpush.msra.mxu0 %v198
    %208 = vmatpush.msra.mxu0 %v197
    %209 = vmatpush.msra.mxu0 %v196
    %210 = vmatpush.msra.mxu0 %v195
    %211 = vmatpush.msra.mxu0 %v194
    %212 = vmatpush.msra.mxu0 %v193
    %213 = vmatpush.msra.mxu0 %v192
    %214 = vmatpush.msra.mxu0 %v191
    %215 = vmatpush.msra.mxu0 %v190
    %216 = vmatpush.msra.mxu0 %v189
    %217 = vmatpush.msra.mxu0 %v188
    %218 = vmatpush.msra.mxu0 %v187
    %219 = vmatpush.msra.mxu0 %v186
    %220 = vmatpush.msra.mxu0 %v185
    %221 = vmatmul.f32.gmra.mxu0 %v169
    %v222 = vpop.f32.mrf.mxu0
    %v223 = vadd.f32 %v203, %v222
    %224 = vmatmul.f32.gmra.mxu0 %v170
    %v225 = vpop.f32.mrf.mxu0
    %v226 = vadd.f32 %v203, %v225
    %227 = vmatmul.f32.gmra.mxu0 %v171
    %v228 = vpop.f32.mrf.mxu0
    %v229 = vadd.f32 %v203, %v228
    %230 = vmatmul.f32.gmra.mxu0 %v172
    %v231 = vpop.f32.mrf.mxu0
    %v232 = vadd.f32 %v203, %v231
    %233 = vmatmul.f32.gmra.mxu0 %v173
    %v234 = vpop.f32.mrf.mxu0
    %v235 = vadd.f32 %v203, %v234
    %236 = vmatmul.f32.gmra.mxu0 %v174
    %v237 = vpop.f32.mrf.mxu0
    %v238 = vadd.f32 %v203, %v237
    %239 = vmatmul.f32.gmra.mxu0 %v175
    %v240 = vpop.f32.mrf.mxu0
    %v241 = vadd.f32 %v203, %v240
    %242 = vmatmul.f32.gmra.mxu0 %v176
    %v243 = vpop.f32.mrf.mxu0
    %v244 = vadd.f32 %v203, %v243
    %245 = vmatmul.f32.gmra.mxu0 %v177
    %v246 = vpop.f32.mrf.mxu0
    %v247 = vadd.f32 %v203, %v246
    %248 = vmatmul.f32.gmra.mxu0 %v178
    %v249 = vpop.f32.mrf.mxu0
    %v250 = vadd.f32 %v203, %v249
    %251 = vmatmul.f32.gmra.mxu0 %v179
    %v252 = vpop.f32.mrf.mxu0
    %v253 = vadd.f32 %v203, %v252
    %254 = vmatmul.f32.gmra.mxu0 %v180
    %v255 = vpop.f32.mrf.mxu0
    %v256 = vadd.f32 %v203, %v255
    %257 = vmatmul.f32.gmra.mxu0 %v181
    %v258 = vpop.f32.mrf.mxu0
    %v259 = vadd.f32 %v203, %v258
    %260 = vmatmul.f32.gmra.mxu0 %v182
    %v261 = vpop.f32.mrf.mxu0
    %v262 = vadd.f32 %v203, %v261
    %263 = vmatmul.f32.gmra.mxu0 %v183
    %v264 = vpop.f32.mrf.mxu0
    %v265 = vadd.f32 %v203, %v264
    %266 = vmatmul.f32.gmra.mxu0 %v184
    %v267 = vpop.f32.mrf.mxu0
    %v268 = vadd.f32 %v203, %v267
    %269 = vdwg.mxu0
    %v270 = vadd.f32 %v223, %v68
    %v271 = vadd.f32 %v226, %v69
    %v272 = vadd.f32 %v229, %v70
    %v273 = vadd.f32 %v232, %v71
    %v274 = vadd.f32 %v235, %v72
    %v275 = vadd.f32 %v238, %v73
    %v276 = vadd.f32 %v241, %v74
    %v277 = vadd.f32 %v244, %v75
    %v278 = vadd.f32 %v247, %v76
    %v279 = vadd.f32 %v250, %v77
    %v280 = vadd.f32 %v253, %v78
    %v281 = vadd.f32 %v256, %v79
    %v282 = vadd.f32 %v259, %v80
    %v283 = vadd.f32 %v262, %v81
    %v284 = vadd.f32 %v265, %v82
    %v285 = vadd.f32 %v268, %v83
    %286 = vadd.xlane.f32.xlu0 %v270
    %v287 = vpop.xlane.xlu0 %286
    %288 = vadd.xlane.f32.xlu0 %v271
    %v289 = vpop.xlane.xlu0 %288
    %290 = vadd.xlane.f32.xlu0 %v272
    %v291 = vpop.xlane.xlu0 %290
    %292 = vadd.xlane.f32.xlu0 %v273
    %v293 = vpop.xlane.xlu0 %292
    %294 = vadd.xlane.f32.xlu0 %v274
    %v295 = vpop.xlane.xlu0 %294
    %296 = vadd.xlane.f32.xlu0 %v275
    %v297 = vpop.xlane.xlu0 %296
    %298 = vadd.xlane.f32.xlu0 %v276
    %v299 = vpop.xlane.xlu0 %298
    %300 = vadd.xlane.f32.xlu0 %v277
    %v301 = vpop.xlane.xlu0 %300
    %302 = vadd.xlane.f32.xlu0 %v278
    %v303 = vpop.xlane.xlu0 %302
    %304 = vadd.xlane.f32.xlu0 %v279
    %v305 = vpop.xlane.xlu0 %304
    %306 = vadd.xlane.f32.xlu0 %v280
    %v307 = vpop.xlane.xlu0 %306
    %308 = vadd.xlane.f32.xlu0 %v281
    %v309 = vpop.xlane.xlu0 %308
    %310 = vadd.xlane.f32.xlu0 %v282
    %v311 = vpop.xlane.xlu0 %310
    %312 = vadd.xlane.f32.xlu0 %v283
    %v313 = vpop.xlane.xlu0 %312
    %314 = vadd.xlane.f32.xlu0 %v284
    %v315 = vpop.xlane.xlu0 %314
    %316 = vadd.xlane.f32.xlu0 %v285
    %v317 = vpop.xlane.xlu0 %316
    %v318 = vmul.f32 %v270, %v270
    %v319 = vmul.f32 %v271, %v271
    %v320 = vmul.f32 %v272, %v272
    %v321 = vmul.f32 %v273, %v273
    %v322 = vmul.f32 %v274, %v274
    %v323 = vmul.f32 %v275, %v275
    %v324 = vmul.f32 %v276, %v276
    %v325 = vmul.f32 %v277, %v277
    %v326 = vmul.f32 %v278, %v278
    %v327 = vmul.f32 %v279, %v279
    %v328 = vmul.f32 %v280, %v280
    %v329 = vmul.f32 %v281, %v281
    %v330 = vmul.f32 %v282, %v282
    %v331 = vmul.f32 %v283, %v283
    %v332 = vmul.f32 %v284, %v284
    %v333 = vmul.f32 %v285, %v285
    %334 = vadd.xlane.f32.xlu0 %v318
    %v335 = vpop.xlane.xlu0 %334
    %336 = vadd.xlane.f32.xlu0 %v319
    %v337 = vpop.xlane.xlu0 %336
    %338 = vadd.xlane.f32.xlu0 %v320
    %v339 = vpop.xlane.xlu0 %338
    %340 = vadd.xlane.f32.xlu0 %v321
    %v341 = vpop.xlane.xlu0 %340
    %342 = vadd.xlane.f32.xlu0 %v322
    %v343 = vpop.xlane.xlu0 %342
    %344 = vadd.xlane.f32.xlu0 %v323
    %v345 = vpop.xlane.xlu0 %344
    %346 = vadd.xlane.f32.xlu0 %v324
    %v347 = vpop.xlane.xlu0 %346
    %348 = vadd.xlane.f32.xlu0 %v325
    %v349 = vpop.xlane.xlu0 %348
    %350 = vadd.xlane.f32.xlu0 %v326
    %v351 = vpop.xlane.xlu0 %350
    %352 = vadd.xlane.f32.xlu0 %v327
    %v353 = vpop.xlane.xlu0 %352
    %354 = vadd.xlane.f32.xlu0 %v328
    %v355 = vpop.xlane.xlu0 %354
    %356 = vadd.xlane.f32.xlu0 %v329
    %v357 = vpop.xlane.xlu0 %356
    %358 = vadd.xlane.f32.xlu0 %v330
    %v359 = vpop.xlane.xlu0 %358
    %360 = vadd.xlane.f32.xlu0 %v331
    %v361 = vpop.xlane.xlu0 %360
    %362 = vadd.xlane.f32.xlu0 %v332
    %v363 = vpop.xlane.xlu0 %362
    %364 = vadd.xlane.f32.xlu0 %v333
    %v365 = vpop.xlane.xlu0 %364
    %v366 = vmul.f32 %v287, 0.03125
    %v367 = vmul.f32 %v289, 0.03125
    %v368 = vmul.f32 %v291, 0.03125
    %v369 = vmul.f32 %v293, 0.03125
    %v370 = vmul.f32 %v295, 0.03125
    %v371 = vmul.f32 %v297, 0.03125
    %v372 = vmul.f32 %v299, 0.03125
    %v373 = vmul.f32 %v301, 0.03125
    %v374 = vmul.f32 %v303, 0.03125
    %v375 = vmul.f32 %v305, 0.03125
    %v376 = vmul.f32 %v307, 0.03125
    %v377 = vmul.f32 %v309, 0.03125
    %v378 = vmul.f32 %v311, 0.03125
    %v379 = vmul.f32 %v313, 0.03125
    %v380 = vmul.f32 %v315, 0.03125
    %v381 = vmul.f32 %v317, 0.03125
    %v382 = vmul.f32 %v335, 0.03125
    %v383 = vmul.f32 %v337, 0.03125
    %v384 = vmul.f32 %v339, 0.03125
    %v385 = vmul.f32 %v341, 0.03125
    %v386 = vmul.f32 %v343, 0.03125
    %v387 = vmul.f32 %v345, 0.03125
    %v388 = vmul.f32 %v347, 0.03125
    %v389 = vmul.f32 %v349, 0.03125
    %v390 = vmul.f32 %v351, 0.03125
    %v391 = vmul.f32 %v353, 0.03125
    %v392 = vmul.f32 %v355, 0.03125
    %v393 = vmul.f32 %v357, 0.03125
    %v394 = vmul.f32 %v359, 0.03125
    %v395 = vmul.f32 %v361, 0.03125
    %v396 = vmul.f32 %v363, 0.03125
    %v397 = vmul.f32 %v365, 0.03125
    %v398 = vmul.f32 %v366, %v366
    %v399 = vmul.f32 %v367, %v367
    %v400 = vmul.f32 %v368, %v368
    %v401 = vmul.f32 %v369, %v369
    %v402 = vmul.f32 %v370, %v370
    %v403 = vmul.f32 %v371, %v371
    %v404 = vmul.f32 %v372, %v372
    %v405 = vmul.f32 %v373, %v373
    %v406 = vmul.f32 %v374, %v374
    %v407 = vmul.f32 %v375, %v375
    %v408 = vmul.f32 %v376, %v376
    %v409 = vmul.f32 %v377, %v377
    %v410 = vmul.f32 %v378, %v378
    %v411 = vmul.f32 %v379, %v379
    %v412 = vmul.f32 %v380, %v380
    %v413 = vmul.f32 %v381, %v381
    %v414 = vsub.f32 %v382, %v398
    %v415 = vsub.f32 %v383, %v399
    %v416 = vsub.f32 %v384, %v400
    %v417 = vsub.f32 %v385, %v401
    %v418 = vsub.f32 %v386, %v402
    %v419 = vsub.f32 %v387, %v403
    %v420 = vsub.f32 %v388, %v404
    %v421 = vsub.f32 %v389, %v405
    %v422 = vsub.f32 %v390, %v406
    %v423 = vsub.f32 %v391, %v407
    %v424 = vsub.f32 %v392, %v408
    %v425 = vsub.f32 %v393, %v409
    %v426 = vsub.f32 %v394, %v410
    %v427 = vsub.f32 %v395, %v411
    %v428 = vsub.f32 %v396, %v412
    %v429 = vsub.f32 %v397, %v413
    %v430 = vmax.f32 %v414, 0.0
    %v431 = vmax.f32 %v415, 0.0
    %v432 = vmax.f32 %v416, 0.0
    %v433 = vmax.f32 %v417, 0.0
    %v434 = vmax.f32 %v418, 0.0
    %v435 = vmax.f32 %v419, 0.0
    %v436 = vmax.f32 %v420, 0.0
    %v437 = vmax.f32 %v421, 0.0
    %v438 = vmax.f32 %v422, 0.0
    %v439 = vmax.f32 %v423, 0.0
    %v440 = vmax.f32 %v424, 0.0
    %v441 = vmax.f32 %v425, 0.0
    %v442 = vmax.f32 %v426, 0.0
    %v443 = vmax.f32 %v427, 0.0
    %v444 = vmax.f32 %v428, 0.0
    %v445 = vmax.f32 %v429, 0.0
    %v446 = vsub.f32 %v270, %v366
    %v447 = vsub.f32 %v271, %v367
    %v448 = vsub.f32 %v272, %v368
    %v449 = vsub.f32 %v273, %v369
    %v450 = vsub.f32 %v274, %v370
    %v451 = vsub.f32 %v275, %v371
    %v452 = vsub.f32 %v276, %v372
    %v453 = vsub.f32 %v277, %v373
    %v454 = vsub.f32 %v278, %v374
    %v455 = vsub.f32 %v279, %v375
    %v456 = vsub.f32 %v280, %v376
    %v457 = vsub.f32 %v281, %v377
    %v458 = vsub.f32 %v282, %v378
    %v459 = vsub.f32 %v283, %v379
    %v460 = vsub.f32 %v284, %v380
    %v461 = vsub.f32 %v285, %v381
    %v462 = vadd.f32 %v430, 1e-05
    %v463 = vadd.f32 %v431, 1e-05
    %v464 = vadd.f32 %v432, 1e-05
    %v465 = vadd.f32 %v433, 1e-05
    %v466 = vadd.f32 %v434, 1e-05
    %v467 = vadd.f32 %v435, 1e-05
    %v468 = vadd.f32 %v436, 1e-05
    %v469 = vadd.f32 %v437, 1e-05
    %v470 = vadd.f32 %v438, 1e-05
    %v471 = vadd.f32 %v439, 1e-05
    %v472 = vadd.f32 %v440, 1e-05
    %v473 = vadd.f32 %v441, 1e-05
    %v474 = vadd.f32 %v442, 1e-05
    %v475 = vadd.f32 %v443, 1e-05
    %v476 = vadd.f32 %v444, 1e-05
    %v477 = vadd.f32 %v445, 1e-05
    %v478 = vrsqrt.pop %v462
    %v479 = vmul.f32 %v478, %v462
    %v480 = vmul.f32 %v479, %v478
    %v481 = vmul.f32 0.5, %v480
    %v482 = vsub.f32 1.5, %v481
    %v483 = vmul.f32 %v478, %v482
    %vm484 = vweird.f32 %v462
    %vm485 = vweird.f32 %v478
    %vm486 = vmor %vm484, %vm485
    %v487 = vsel %vm486, %v478, %v483
    %v488 = vrsqrt.pop %v463
    %v489 = vmul.f32 %v488, %v463
    %v490 = vmul.f32 %v489, %v488
    %v491 = vmul.f32 0.5, %v490
    %v492 = vsub.f32 1.5, %v491
    %v493 = vmul.f32 %v488, %v492
    %vm494 = vweird.f32 %v463
    %vm495 = vweird.f32 %v488
    %vm496 = vmor %vm494, %vm495
    %v497 = vsel %vm496, %v488, %v493
    %v498 = vrsqrt.pop %v464
    %v499 = vmul.f32 %v498, %v464
    %v500 = vmul.f32 %v499, %v498
    %v501 = vmul.f32 0.5, %v500
    %v502 = vsub.f32 1.5, %v501
    %v503 = vmul.f32 %v498, %v502
    %vm504 = vweird.f32 %v464
    %vm505 = vweird.f32 %v498
    %vm506 = vmor %vm504, %vm505
    %v507 = vsel %vm506, %v498, %v503
    %v508 = vrsqrt.pop %v465
    %v509 = vmul.f32 %v508, %v465
    %v510 = vmul.f32 %v509, %v508
    %v511 = vmul.f32 0.5, %v510
    %v512 = vsub.f32 1.5, %v511
    %v513 = vmul.f32 %v508, %v512
    %vm514 = vweird.f32 %v465
    %vm515 = vweird.f32 %v508
    %vm516 = vmor %vm514, %vm515
    %v517 = vsel %vm516, %v508, %v513
    %v518 = vrsqrt.pop %v466
    %v519 = vmul.f32 %v518, %v466
    %v520 = vmul.f32 %v519, %v518
    %v521 = vmul.f32 0.5, %v520
    %v522 = vsub.f32 1.5, %v521
    %v523 = vmul.f32 %v518, %v522
    %vm524 = vweird.f32 %v466
    %vm525 = vweird.f32 %v518
    %vm526 = vmor %vm524, %vm525
    %v527 = vsel %vm526, %v518, %v523
    %v528 = vrsqrt.pop %v467
    %v529 = vmul.f32 %v528, %v467
    %v530 = vmul.f32 %v529, %v528
    %v531 = vmul.f32 0.5, %v530
    %v532 = vsub.f32 1.5, %v531
    %v533 = vmul.f32 %v528, %v532
    %vm534 = vweird.f32 %v467
    %vm535 = vweird.f32 %v528
    %vm536 = vmor %vm534, %vm535
    %v537 = vsel %vm536, %v528, %v533
    %v538 = vrsqrt.pop %v468
    %v539 = vmul.f32 %v538, %v468
    %v540 = vmul.f32 %v539, %v538
    %v541 = vmul.f32 0.5, %v540
    %v542 = vsub.f32 1.5, %v541
    %v543 = vmul.f32 %v538, %v542
    %vm544 = vweird.f32 %v468
    %vm545 = vweird.f32 %v538
    %vm546 = vmor %vm544, %vm545
    %v547 = vsel %vm546, %v538, %v543
    %v548 = vrsqrt.pop %v469
    %v549 = vmul.f32 %v548, %v469
    %v550 = vmul.f32 %v549, %v548
    %v551 = vmul.f32 0.5, %v550
    %v552 = vsub.f32 1.5, %v551
    %v553 = vmul.f32 %v548, %v552
    %vm554 = vweird.f32 %v469
    %vm555 = vweird.f32 %v548
    %vm556 = vmor %vm554, %vm555
    %v557 = vsel %vm556, %v548, %v553
    %v558 = vrsqrt.pop %v470
    %v559 = vmul.f32 %v558, %v470
    %v560 = vmul.f32 %v559, %v558
    %v561 = vmul.f32 0.5, %v560
    %v562 = vsub.f32 1.5, %v561
    %v563 = vmul.f32 %v558, %v562
    %vm564 = vweird.f32 %v470
    %vm565 = vweird.f32 %v558
    %vm566 = vmor %vm564, %vm565
    %v567 = vsel %vm566, %v558, %v563
    %v568 = vrsqrt.pop %v471
    %v569 = vmul.f32 %v568, %v471
    %v570 = vmul.f32 %v569, %v568
    %v571 = vmul.f32 0.5, %v570
    %v572 = vsub.f32 1.5, %v571
    %v573 = vmul.f32 %v568, %v572
    %vm574 = vweird.f32 %v471
    %vm575 = vweird.f32 %v568
    %vm576 = vmor %vm574, %vm575
    %v577 = vsel %vm576, %v568, %v573
    %v578 = vrsqrt.pop %v472
    %v579 = vmul.f32 %v578, %v472
    %v580 = vmul.f32 %v579, %v578
    %v581 = vmul.f32 0.5, %v580
    %v582 = vsub.f32 1.5, %v581
    %v583 = vmul.f32 %v578, %v582
    %vm584 = vweird.f32 %v472
    %vm585 = vweird.f32 %v578
    %vm586 = vmor %vm584, %vm585
    %v587 = vsel %vm586, %v578, %v583
    %v588 = vrsqrt.pop %v473
    %v589 = vmul.f32 %v588, %v473
    %v590 = vmul.f32 %v589, %v588
    %v591 = vmul.f32 0.5, %v590
    %v592 = vsub.f32 1.5, %v591
    %v593 = vmul.f32 %v588, %v592
    %vm594 = vweird.f32 %v473
    %vm595 = vweird.f32 %v588
    %vm596 = vmor %vm594, %vm595
    %v597 = vsel %vm596, %v588, %v593
    %v598 = vrsqrt.pop %v474
    %v599 = vmul.f32 %v598, %v474
    %v600 = vmul.f32 %v599, %v598
    %v601 = vmul.f32 0.5, %v600
    %v602 = vsub.f32 1.5, %v601
    %v603 = vmul.f32 %v598, %v602
    %vm604 = vweird.f32 %v474
    %vm605 = vweird.f32 %v598
    %vm606 = vmor %vm604, %vm605
    %v607 = vsel %vm606, %v598, %v603
    %v608 = vrsqrt.pop %v475
    %v609 = vmul.f32 %v608, %v475
    %v610 = vmul.f32 %v609, %v608
    %v611 = vmul.f32 0.5, %v610
    %v612 = vsub.f32 1.5, %v611
    %v613 = vmul.f32 %v608, %v612
    %vm614 = vweird.f32 %v475
    %vm615 = vweird.f32 %v608
    %vm616 = vmor %vm614, %vm615
    %v617 = vsel %vm616, %v608, %v613
    %v618 = vrsqrt.pop %v476
    %v619 = vmul.f32 %v618, %v476
    %v620 = vmul.f32 %v619, %v618
    %v621 = vmul.f32 0.5, %v620
    %v622 = vsub.f32 1.5, %v621
    %v623 = vmul.f32 %v618, %v622
    %vm624 = vweird.f32 %v476
    %vm625 = vweird.f32 %v618
    %vm626 = vmor %vm624, %vm625
    %v627 = vsel %vm626, %v618, %v623
    %v628 = vrsqrt.pop %v477
    %v629 = vmul.f32 %v628, %v477
    %v630 = vmul.f32 %v629, %v628
    %v631 = vmul.f32 0.5, %v630
    %v632 = vsub.f32 1.5, %v631
    %v633 = vmul.f32 %v628, %v632
    %vm634 = vweird.f32 %v477
    %vm635 = vweird.f32 %v628
    %vm636 = vmor %vm634, %vm635
    %v637 = vsel %vm636, %v628, %v633
    %v638 = vmul.f32 %v446, %v487
    %v639 = vmul.f32 %v447, %v497
    %v640 = vmul.f32 %v448, %v507
    %v641 = vmul.f32 %v449, %v517
    %v642 = vmul.f32 %v450, %v527
    %v643 = vmul.f32 %v451, %v537
    %v644 = vmul.f32 %v452, %v547
    %v645 = vmul.f32 %v453, %v557
    %v646 = vmul.f32 %v454, %v567
    %v647 = vmul.f32 %v455, %v577
    %v648 = vmul.f32 %v456, %v587
    %v649 = vmul.f32 %v457, %v597
    %v650 = vmul.f32 %v458, %v607
    %v651 = vmul.f32 %v459, %v617
    %v652 = vmul.f32 %v460, %v627
    %v653 = vmul.f32 %v461, %v637
    %654 = vst [vmem:[#allocation8] sm:$0xff] %v638
    %655 = vst [vmem:[#allocation8 + $0x8] sm:$0xff] %v639
    %656 = vst [vmem:[#allocation8 + $0x10] sm:$0xff] %v640
    %657 = vst [vmem:[#allocation8 + $0x18] sm:$0xff] %v641
    %658 = vst [vmem:[#allocation8 + $0x20] sm:$0xff] %v642
    %659 = vst [vmem:[#allocation8 + $0x28] sm:$0xff] %v643
    %660 = vst [vmem:[#allocation8 + $0x30] sm:$0xff] %v644
    %661 = vst [vmem:[#allocation8 + $0x38] sm:$0xff] %v645
    %662 = vst [vmem:[#allocation8 + $0x40] sm:$0xff] %v646
    %663 = vst [vmem:[#allocation8 + $0x48] sm:$0xff] %v647
    %664 = vst [vmem:[#allocation8 + $0x50] sm:$0xff] %v648
    %665 = vst [vmem:[#allocation8 + $0x58] sm:$0xff] %v649
    %666 = vst [vmem:[#allocation8 + $0x60] sm:$0xff] %v650
    %667 = vst [vmem:[#allocation8 + $0x68] sm:$0xff] %v651
    %668 = vst [vmem:[#allocation8 + $0x70] sm:$0xff] %v652
    %669 = vst [vmem:[#allocation8 + $0x78] sm:$0xff] %v653
    // Predicated region
    $region34: #{tpu_custom_call.1} parent=1 // pred_check
      _
    $region35: #{tpu_custom_call.1} parent=1 // pred_check_branch
      %671 = sbr.rel (0) target = $region37
    $region36: #{tpu_custom_call.1} parent=1 // pred_region
      %673 = vsyncadd [#allocation4], 0
      %s674 = sshll.u32 [#allocation8], 4
      %s675 = int_to_ptr.vmem [resolvable:$true] %s674
      %s676 = sshll.u32 %s5, 4
      %s677 = int_to_ptr.hbm [resolvable:$true] %s676
      %682 = dma.vmem_to_hbm [thread:$0]  %s675, 2048, %s677, [#allocation4], 128, 128, 8
    $region37: #{tpu_custom_call.1} parent=1 // pred_fallthru
      _
    // Predicated region
    $region38: #{tpu_custom_call.1} parent=1 // pred_check
      _
    $region39: #{tpu_custom_call.1} parent=1 // pred_check_branch
      %684 = sbr.rel (0) target = $region41
    $region40: #{tpu_custom_call.1} parent=1 // pred_region
      %686 = dma.done [#allocation4], 2048
    $region41: #{tpu_custom_call.1} parent=1 // pred_fallthru
      _
    %687 = vsyncpa [#allocation3], 1
    %688 = vsyncpa [#allocation6], 1
    %689 = vsyncpa [#allocation4], 1

</llo_original>
